<compile_context>
chip_gen: v7x
topology: tpu7x:2x2x1
jax: 0.10.0
libtpu: 0.0.40
codegen_flags: <defaults>
</compile_context>

<pallas_src>
import jax
import jax.numpy as jnp
from jax.experimental import pallas as pl
from jax.experimental.pallas import tpu as pltpu

EMB_DIM = 100          # multiheadWDCNN output dim implied by nn.Linear(100, 1)
EMB_PAD = 128          # lane-aligned embedding width used inside the kernel


def _round_up(x, m):
    return ((x + m - 1) // m) * m


def _siamese_kernel(x1_ref, x2_ref, w_emb_ref, w_fc_ref, b_fc_ref, out_ref):
    """Fused Siamese forward for one batch tile.

    x1_ref, x2_ref : [TB, D]      (VMEM, pipelined per grid step)
    w_emb_ref      : [D, 128]     (VMEM, resident; cols >= EMB_DIM are zero)
    w_fc_ref       : [1, 128]     (VMEM, resident; cols >= EMB_DIM are zero)
    b_fc_ref       : [1, 1]       (SMEM scalar)
    out_ref        : [TB, 1]
    """
    # (x1 - x2) on the VPU, single shared-weight matmul on the MXU (b_emb cancels).
    diff = x1_ref[...] - x2_ref[...]                                        # [TB, D]
    y = jnp.dot(diff, w_emb_ref[...], preferred_element_type=jnp.float32)   # [TB, 128]

    # FC(100->1) fused into the square as a weighted lane reduce (VPU mul + XLU reduce):
    # sum_e w_fc[e] * (y1[e]-y2[e])**2 ; padded lanes have w_fc == 0.
    s = jnp.sum(y * y * w_fc_ref[...], axis=-1, keepdims=True)              # [TB, 1]

    out_ref[...] = jax.nn.sigmoid(s + b_fc_ref[0, 0])


def siamese_forward(x1, x2, w_emb, b_emb, w_fc, b_fc, *, block_b=512):
    """Runs the fused Pallas kernel. Returns shape [B] (torch .squeeze() semantics).

    Note: for B == 1 torch's .squeeze() would return a 0-d scalar; this wrapper keeps [B].
    """
    del b_emb  # cancels exactly in (y1 - y2); never touched by the kernel.
    B, D = x1.shape
    x1 = x1.astype(jnp.float32)
    x2 = x2.astype(jnp.float32)

    # Zero-pad embedding width EMB_DIM -> EMB_PAD for lane alignment.
    w_emb_p = jnp.zeros((D, EMB_PAD), jnp.float32).at[:, :EMB_DIM].set(
        w_emb.astype(jnp.float32))
    w_fc_row = jnp.zeros((1, EMB_PAD), jnp.float32).at[0, :EMB_DIM].set(
        w_fc.astype(jnp.float32)[:, 0])
    b_fc_s = jnp.asarray(b_fc, jnp.float32).reshape(1, 1)

    # Batch tiling: sublane-aligned tile, pad B up to a multiple of it.
    tb = min(block_b, _round_up(B, 8))
    b_pad = _round_up(B, tb)
    if b_pad != B:
        pad = b_pad - B
        x1 = jnp.pad(x1, ((0, pad), (0, 0)))
        x2 = jnp.pad(x2, ((0, pad), (0, 0)))

    grid = (b_pad // tb,)
    out = pl.pallas_call(
        _siamese_kernel,
        out_shape=jax.ShapeDtypeStruct((b_pad, 1), jnp.float32),
        grid=grid,
        in_specs=[
            pl.BlockSpec((tb, D), lambda i: (i, 0)),          # x1 tile (pipelined)
            pl.BlockSpec((tb, D), lambda i: (i, 0)),          # x2 tile (pipelined)
            pl.BlockSpec((D, EMB_PAD), lambda i: (0, 0)),     # w_emb (resident)
            pl.BlockSpec((1, EMB_PAD), lambda i: (0, 0)),     # w_fc row (resident)
            pl.BlockSpec(memory_space=pltpu.SMEM),            # b_fc scalar
        ],
        out_specs=pl.BlockSpec((tb, 1), lambda i: (i, 0)),
        compiler_params=pltpu.CompilerParams(
            dimension_semantics=("parallel",),
            vmem_limit_bytes=64 * 1024 * 1024,
        ),
    )(x1, x2, w_emb_p, w_fc_row, b_fc_s)

    return out[:B, 0]


def init_params(key, d_in):
    """Deterministic synthetic parameters (shapes match the module's __init__)."""
    k1, k2, k3, k4 = jax.random.split(key, 4)
    w_emb = jax.random.normal(k1, (d_in, EMB_DIM), jnp.float32) * 0.1
    b_emb = jax.random.normal(k2, (1, EMB_DIM), jnp.float32) * 0.1
    w_fc = jax.random.normal(k3, (EMB_DIM, 1), jnp.float32) * 0.1  # Linear(100,1) weight^T
    b_fc = jax.random.normal(k4, (1, 1), jnp.float32) * 0.1        # Linear(100,1) bias
    return w_emb, b_emb, w_fc, b_fc


def reference_forward(x1, x2, w_emb, b_emb, w_fc, b_fc):
    """Pure-JAX reference mirroring the PyTorch module."""
    y1 = x1 @ w_emb + b_emb
    y2 = x2 @ w_emb + b_emb
    c = (y1 - y2) ** 2
    s = c @ w_fc + b_fc[0, 0]
    return jax.nn.sigmoid(jnp.squeeze(s, axis=-1))


if __name__ == "__main__":
    B, D = 2, 32  # small: batch=2, input feature dim=32
    key = jax.random.PRNGKey(0)
    kx1, kx2, kp = jax.random.split(key, 3)

    x1 = jax.random.normal(kx1, (B, D), jnp.float32)
    x2 = jax.random.normal(kx2, (B, D), jnp.float32)
    w_emb, b_emb, w_fc, b_fc = init_params(kp, D)

    out = siamese_forward(x1, x2, w_emb, b_emb, w_fc, b_fc)
    out = jax.block_until_ready(out)

    ref = reference_forward(x1, x2, w_emb, b_emb, w_fc, b_fc)
    assert out.shape == (B,), out.shape
    assert jnp.allclose(out, ref, atol=1e-5, rtol=1e-5), (out, ref)

    print("KERNEL_OK")
</pallas_src>

<mosaic_0001>
module attributes {stable_mosaic.version = 11 : i64} {
  func.func @_siamese_kernel(%arg0: i32, %arg1: memref<8x32xf32, #tpu.memory_space<vmem>>, %arg2: memref<8x32xf32, #tpu.memory_space<vmem>>, %arg3: memref<32x128xf32, #tpu.memory_space<vmem>>, %arg4: memref<1x128xf32, #tpu.memory_space<vmem>>, %arg5: memref<1x1xf32, #tpu.memory_space<smem>>, %arg6: memref<8x1xf32, #tpu.memory_space<vmem>>) attributes {dimension_semantics = [#tpu.dimension_semantics<parallel>], iteration_bounds = array<i64: 1>, scalar_prefetch = 0 : i64, scratch_operands = 0 : i64, tpu.core_type = #tpu.core_type<tc>, window_params = [{transform_indices = @transform_0, window_bounds = array<i64: 8, 32>}, {transform_indices = @transform_1, window_bounds = array<i64: 8, 32>}, {pipeline_mode = #tpu.pipeline_mode<synchronous>, transform_indices = @transform_2, window_bounds = array<i64: 32, 128>}, {pipeline_mode = #tpu.pipeline_mode<synchronous>, transform_indices = @transform_3, window_bounds = array<i64: 1, 128>}, {transform_indices = @transform_4, window_bounds = array<i64: 1, 1>}, {transform_indices = @transform_5, window_bounds = array<i64: 8, 1>}]} {
    %c0 = arith.constant 0 : index
    %c0_0 = arith.constant 0 : index
    %0 = vector.load %arg1[%c0, %c0_0] : memref<8x32xf32, #tpu.memory_space<vmem>>, vector<8x32xf32>
    %c0_1 = arith.constant 0 : index
    %c0_2 = arith.constant 0 : index
    %1 = vector.load %arg2[%c0_1, %c0_2] : memref<8x32xf32, #tpu.memory_space<vmem>>, vector<8x32xf32>
    %2 = arith.subf %0, %1 : vector<8x32xf32>
    %c0_3 = arith.constant 0 : index
    %c0_4 = arith.constant 0 : index
    %3 = vector.load %arg3[%c0_3, %c0_4] : memref<32x128xf32, #tpu.memory_space<vmem>>, vector<32x128xf32>
    %cst = arith.constant dense<0.000000e+00> : vector<8x128xf32>
    %4 = tpu.matmul %2, %3, %cst {dimension_numbers = #tpu.dot_dimension_numbers<[1], [0], [0], [1], [0, 0, 1, 1], [], []>} : vector<8x32xf32>, vector<32x128xf32>, vector<8x128xf32> -> vector<8x128xf32>
    %5 = arith.mulf %4, %4 : vector<8x128xf32>
    %c0_5 = arith.constant 0 : index
    %c0_6 = arith.constant 0 : index
    %6 = vector.load %arg4[%c0_5, %c0_6] : memref<1x128xf32, #tpu.memory_space<vmem>>, vector<1x128xf32>
    %7 = vector.broadcast %6 : vector<1x128xf32> to vector<8x128xf32>
    %8 = arith.mulf %5, %7 : vector<8x128xf32>
    %cst_7 = arith.constant dense<0.000000e+00> : vector<8xf32>
    %9 = vector.multi_reduction <add>, %8, %cst_7 [1] : vector<8x128xf32> to vector<8xf32>
    %10 = vector.shape_cast %9 : vector<8xf32> to vector<8x1xf32>
    %c0_8 = arith.constant 0 : index
    %c0_9 = arith.constant 0 : index
    %11 = memref.load %arg5[%c0_8, %c0_9] : memref<1x1xf32, #tpu.memory_space<smem>>
    %12 = vector.broadcast %11 : f32 to vector<8x1xf32>
    %13 = arith.addf %10, %12 : vector<8x1xf32>
    %14 = arith.negf %13 : vector<8x1xf32>
    %15 = math.exp %14 : vector<8x1xf32>
    %cst_10 = arith.constant 1.000000e+00 : f32
    %16 = vector.broadcast %cst_10 : f32 to vector<8x1xf32>
    %17 = arith.addf %16, %15 : vector<8x1xf32>
    %18 = arith.divf %16, %17 : vector<8x1xf32>
    %c0_11 = arith.constant 0 : index
    %c0_12 = arith.constant 0 : index
    %19 = vector.load %arg6[%c0_11, %c0_12] : memref<8x1xf32, #tpu.memory_space<vmem>>, vector<8x1xf32>
    tpu.vector_store %arg6[%c0_11, %c0_12], %18 {strides = array<i32>} : memref<8x1xf32, #tpu.memory_space<vmem>>, vector<8x1xf32>,
    return
  }
  func.func @transform_0(%arg0: i32) -> (i32, i32) {
    %c0_i32 = arith.constant 0 : i32
    %c0_i32_0 = arith.constant 0 : i32
    return %arg0, %c0_i32 : i32, i32
  }
  func.func @transform_1(%arg0: i32) -> (i32, i32) {
    %c0_i32 = arith.constant 0 : i32
    %c0_i32_0 = arith.constant 0 : i32
    return %arg0, %c0_i32 : i32, i32
  }
  func.func @transform_2(%arg0: i32) -> (i32, i32) {
    %c0_i32 = arith.constant 0 : i32
    %c0_i32_0 = arith.constant 0 : i32
    %c0_i32_1 = arith.constant 0 : i32
    return %c0_i32, %c0_i32_0 : i32, i32
  }
  func.func @transform_3(%arg0: i32) -> (i32, i32) {
    %c0_i32 = arith.constant 0 : i32
    %c0_i32_0 = arith.constant 0 : i32
    %c0_i32_1 = arith.constant 0 : i32
    return %c0_i32, %c0_i32_0 : i32, i32
  }
  func.func @transform_4(%arg0: i32) -> (i32, i32) {
    %c0_i32 = arith.constant 0 : i32
    %c0_i32_0 = arith.constant 0 : i32
    %c0_i32_1 = arith.constant 0 : i32
    return %c0_i32, %c0_i32_0 : i32, i32
  }
  func.func @transform_5(%arg0: i32) -> (i32, i32) {
    %c0_i32 = arith.constant 0 : i32
    %c0_i32_0 = arith.constant 0 : i32
    return %arg0, %c0_i32 : i32, i32
  }
}

</mosaic_0001>

<llo_original>
// kernel: tpu_custom_call.1
$region0: #{tpu_custom_call.1}
  #allocation0 [shape = 'u32[]', space=smem, size = 0x4, offset = 0x4, fixed_abs, tag = 'smem constant byte address 0x4 - core index']
  #allocation1 [shape = 'u32[144,128]{1,0:T(1,128)}', space=vmem, size = 0x12000, scoped, tag = 'internal scratch']
  #allocation2 [shape = 'f32[1,1]{1,0:T(1,128)S(6)}', space=smem, size = 0x200, scoped, tag = 'scoped memory for tpu_custom_call.1']
  %s0 = inlined_call_operand.hbm [shape: f32[8,32], index: 0, kind: input, shape index: {}]
  %s1 = inlined_call_operand.hbm [shape: f32[8,32], index: 1, kind: input, shape index: {}]
  %s2 = inlined_call_operand.hbm [shape: f32[32,128], index: 2, kind: input, shape index: {}]
  %s3 = inlined_call_operand.hbm [shape: f32[1,128], index: 3, kind: input, shape index: {}]
  %s4 = inlined_call_operand.<no memory space> [shape: f32[1,1], index: 4, kind: input, shape index: {}]
  %s5 = inlined_call_operand.hbm [shape: f32[8,1], index: 5, kind: output, shape index: {}]
  %s6 = sld [smem:[#allocation0]]
  $region46: #{tpu_custom_call.1} parent=0
    _
  %s8 = ssub.s32 1, %s6
  %s9 = scalar_select 0, %s8, %s6
  %10 = sst [smem:[#allocation2]] %s4
  $region1: #{tpu_custom_call.1} parent=0
    #allocation3 [shape = 'u8[4096]{0}', space=vmem, size = 0x1000, scoped, tag = 'input window, operand 0, single buffered']
    #allocation4 [shape = 's32[1]{0}', space=sflag, size = 0x4, scoped, tag = 'scoped memory for tpu_custom_call.1']
    #allocation5 [shape = 's32[1]{0}', space=sflag, size = 0x4, scoped, tag = 'scoped memory for tpu_custom_call.1']
    #allocation6 [shape = 'u8[4096]{0}', space=vmem, size = 0x1000, scoped, tag = 'input window, operand 1, single buffered']
    #allocation7 [shape = 's32[1]{0}', space=sflag, size = 0x4, scoped, tag = 'scoped memory for tpu_custom_call.1']
    #allocation8 [shape = 'u8[16384]{0}', space=vmem, size = 0x4000, scoped, tag = 'input window, operand 2, single buffered']
    #allocation9 [shape = 'u8[512]{0}', space=vmem, size = 0x400, scoped, tag = 'input window, operand 3, single buffered']
    #allocation10 [shape = 's32[1]{0}', space=sflag, size = 0x4, scoped, tag = 'scoped memory for tpu_custom_call.1']
    #allocation11 [shape = 'u8[4096]{0}', space=vmem, size = 0x1000, scoped, tag = 'output window, operand 0, single buffered']
    %11 = vsyncpa [#allocation4], 0
    %12 = vsyncpa [#allocation7], 0
    %13 = vsyncpa [#allocation10], 0
    %14 = vsyncpa [#allocation5], 0
    // Predicated region
    $region2: #{tpu_custom_call.1} parent=1 // pred_check
      _
    $region3: #{tpu_custom_call.1} parent=1 // pred_check_branch
      %16 = sbr.rel (0) target = $region5
    $region4: #{tpu_custom_call.1} parent=1 // pred_region
      %s18 = ssub.s32 128, 128
      %19 = vsyncadd [#allocation4], %s18
      %s21 = sshll.u32 [#allocation3], 4
      %s22 = int_to_ptr.vmem [resolvable:$true] %s21
      %24 = dma.hbm_to_vmem [thread:$0]  %s0, 128, %s22, [#allocation4]
    $region5: #{tpu_custom_call.1} parent=1 // pred_fallthru
      _
    // Predicated region
    $region6: #{tpu_custom_call.1} parent=1 // pred_check
      _
    $region7: #{tpu_custom_call.1} parent=1 // pred_check_branch
      %26 = sbr.rel (0) target = $region9
    $region8: #{tpu_custom_call.1} parent=1 // pred_region
      %s28 = ssub.s32 128, 128
      %29 = vsyncadd [#allocation7], %s28
      %s31 = sshll.u32 [#allocation6], 4
      %s32 = int_to_ptr.vmem [resolvable:$true] %s31
      %34 = dma.hbm_to_vmem [thread:$0]  %s1, 128, %s32, [#allocation7]
    $region9: #{tpu_custom_call.1} parent=1 // pred_fallthru
      _
    // Predicated region
    $region10: #{tpu_custom_call.1} parent=1 // pred_check
      _
    $region11: #{tpu_custom_call.1} parent=1 // pred_check_branch
      %36 = sbr.rel (0) target = $region13
    $region12: #{tpu_custom_call.1} parent=1 // pred_region
      %s38 = ssub.s32 512, 512
      %39 = vsyncadd [#allocation7], %s38
      %s40 = sshll.u32 [#allocation8], 4
      %s41 = int_to_ptr.vmem [resolvable:$true] %s40
      %46 = dma.hbm_to_vmem [thread:$0]  %s2, 512, %s41, [#allocation7], 128, 128, 8
    $region13: #{tpu_custom_call.1} parent=1 // pred_fallthru
      _
    // Predicated region
    $region14: #{tpu_custom_call.1} parent=1 // pred_check
      _
    $region15: #{tpu_custom_call.1} parent=1 // pred_check_branch
      %48 = sbr.rel (0) target = $region17
    $region16: #{tpu_custom_call.1} parent=1 // pred_region
      %s50 = ssub.s32 16, 16
      %51 = vsyncadd [#allocation10], %s50
      %s53 = sshll.u32 [#allocation9], 4
      %s54 = int_to_ptr.vmem [resolvable:$true] %s53
      %56 = dma.hbm_to_vmem [thread:$0]  %s3, 16, %s54, [#allocation10]
    $region17: #{tpu_custom_call.1} parent=1 // pred_fallthru
      _
    // Predicated region
    $region18: #{tpu_custom_call.1} parent=1 // pred_check
      _
    $region19: #{tpu_custom_call.1} parent=1 // pred_check_branch
      %58 = sbr.rel (0) target = $region21
    $region20: #{tpu_custom_call.1} parent=1 // pred_region
      _
    $region21: #{tpu_custom_call.1} parent=1 // pred_fallthru
      _
    // Predicated region
    $region22: #{tpu_custom_call.1} parent=1 // pred_check
      _
    $region23: #{tpu_custom_call.1} parent=1 // pred_check_branch
      %60 = sbr.rel (0) target = $region25
    $region24: #{tpu_custom_call.1} parent=1 // pred_region
      %61 = dma.done [#allocation4], 128
    $region25: #{tpu_custom_call.1} parent=1 // pred_fallthru
      _
    // Predicated region
    $region26: #{tpu_custom_call.1} parent=1 // pred_check
      _
    $region27: #{tpu_custom_call.1} parent=1 // pred_check_branch
      %63 = sbr.rel (0) target = $region29
    $region28: #{tpu_custom_call.1} parent=1 // pred_region
      %64 = dma.done [#allocation7], 128
    $region29: #{tpu_custom_call.1} parent=1 // pred_fallthru
      _
    // Predicated region
    $region30: #{tpu_custom_call.1} parent=1 // pred_check
      _
    $region31: #{tpu_custom_call.1} parent=1 // pred_check_branch
      %66 = sbr.rel (0) target = $region33
    $region32: #{tpu_custom_call.1} parent=1 // pred_region
      %67 = dma.done [#allocation7], 512
    $region33: #{tpu_custom_call.1} parent=1 // pred_fallthru
      _
    // Predicated region
    $region34: #{tpu_custom_call.1} parent=1 // pred_check
      _
    $region35: #{tpu_custom_call.1} parent=1 // pred_check_branch
      %69 = sbr.rel (0) target = $region37
    $region36: #{tpu_custom_call.1} parent=1 // pred_region
      %70 = dma.done [#allocation10], 16
    $region37: #{tpu_custom_call.1} parent=1 // pred_fallthru
      _
    %v71 = vld [vmem:[#allocation3] sm:$0xff]
    %v72 = vld [vmem:[#allocation6] sm:$0xff]
    %v73 = vsub.f32 %v71, %v72
    %v74 = vld [vmem:[#allocation8] sm:$0xff]
    %v75 = vld [vmem:[#allocation8 + $0x8] sm:$0xff]
    %v76 = vld [vmem:[#allocation8 + $0x10] sm:$0xff]
    %v77 = vld [vmem:[#allocation8 + $0x18] sm:$0xff]
    %vm78 = vcmask 261120
    %v80 = vsel %vm78, %v73, 0
    %82 = vmatprep.subr.mxu0 0.0
    %83 = vmatpush1.msra.mxu0 %v74
    %84 = vmatprep.subr.mxu0 0.0
    %85 = vmatpush1.msra.mxu0 %v75
    %86 = vmatprep.subr.mxu0 0.0
    %87 = vmatpush1.msra.mxu0 %v76
    %88 = vmatprep.subr.mxu0 0.0
    %89 = vmatpush1.msra.mxu0 %v77
    %90 = vmatprep.subr.mxu0 0.0
    %91 = vmatpush1.msra.mxu0 0.0
    %92 = vmatprep.subr.mxu0 0.0
    %93 = vmatpush1.msra.mxu0 0.0
    %94 = vmatprep.subr.mxu0 0.0
    %95 = vmatpush1.msra.mxu0 0.0
    %96 = vmatprep.subr.mxu0 0.0
    %97 = vmatpush1.msra.mxu0 0.0
    %98 = vmatprep.subr.mxu0 0.0
    %99 = vmatpush1.msra.mxu0 0.0
    %100 = vmatprep.subr.mxu0 0.0
    %101 = vmatpush1.msra.mxu0 0.0
    %102 = vmatprep.subr.mxu0 0.0
    %103 = vmatpush1.msra.mxu0 0.0
    %104 = vmatprep.subr.mxu0 0.0
    %105 = vmatpush1.msra.mxu0 0.0
    %106 = vmatprep.subr.mxu0 0.0
    %107 = vmatpush1.msra.mxu0 0.0
    %108 = vmatprep.subr.mxu0 0.0
    %109 = vmatpush1.msra.mxu0 0.0
    %110 = vmatprep.subr.mxu0 0.0
    %111 = vmatpush1.msra.mxu0 0.0
    %112 = vmatprep.subr.mxu0 0.0
    %113 = vmatpush1.msra.mxu0 0.0
    %114 = vmatprep.subr.mxu0 0.0
    %115 = vmatpush1.msra.mxu0 0.0
    %116 = vmatprep.subr.mxu0 0.0
    %117 = vmatpush1.msra.mxu0 0.0
    %118 = vmatprep.subr.mxu0 0.0
    %119 = vmatpush1.msra.mxu0 0.0
    %120 = vmatprep.subr.mxu0 0.0
    %121 = vmatpush1.msra.mxu0 0.0
    %122 = vmatprep.subr.mxu0 0.0
    %123 = vmatpush1.msra.mxu0 0.0
    %124 = vmatprep.subr.mxu0 0.0
    %125 = vmatpush1.msra.mxu0 0.0
    %126 = vmatprep.subr.mxu0 0.0
    %127 = vmatpush1.msra.mxu0 0.0
    %128 = vmatprep.subr.mxu0 0.0
    %129 = vmatpush1.msra.mxu0 0.0
    %130 = vmatprep.subr.mxu0 0.0
    %131 = vmatpush1.msra.mxu0 0.0
    %132 = vmatprep.subr.mxu0 0.0
    %133 = vmatpush1.msra.mxu0 0.0
    %134 = vmatprep.subr.mxu0 0.0
    %135 = vmatpush1.msra.mxu0 0.0
    %136 = vmatprep.subr.mxu0 0.0
    %137 = vmatpush1.msra.mxu0 0.0
    %138 = vmatprep.subr.mxu0 0.0
    %139 = vmatpush1.msra.mxu0 0.0
    %140 = vmatprep.subr.mxu0 0.0
    %141 = vmatpush1.msra.mxu0 0.0
    %142 = vmatprep.subr.mxu0 0.0
    %143 = vmatpush1.msra.mxu0 0.0
    %144 = vmatprep.subr.mxu0 0.0
    %145 = vmatpush1.msra.mxu0 0.0
    %146 = vmatprep.mubr.f32.mxu0 0.0
    %147 = vmatmul.mubr.f32.gmra.mrb[0].mxu0 %v80
    %v148 = vpop.f32.mrb[0].mxu0
    %v149 = vadd.f32 0.0, %v148
    %v150 = vpop.f32.mrb[0].mxu0
    %151 = vdwg.mxu0
    %v152 = vmul.f32 %v149, %v149
    %v153 = vld [vmem:[#allocation9] sm:$0x1]
    %v155 = vlaneseq
    %v156 = vshrl.u32 %v155, 7
    %v157 = vsub.s32 0, %v156
    %v158 = vrot.slane %v153, %v157
    %v160 = vmul.f32 %v152, %v158
    %161 = vadd.xlane.f32.xlu0 %v160
    %v162 = vpop.xlane.xlu0 %161
    %s163 = sld [smem:[#allocation2]]
    %v164 = vstv %s163
    %v165 = vadd.f32 %v162, %v164
    %v166 = vxor.u32 %v165, 2147483648
    %v167 = vmul.f32 %v166, 1.442695
    %v168 = vpow.pop %v167
    %v169 = vadd.f32 %v168, 1.0
    %v170 = vrcp.pop %v169
    %v171 = vmul.f32 1.0, %v170
    %vm172 = vcmask 7168
    %173 = vst.msk [vmem:[#allocation11] sm:$0xff] %vm172, %v171
    // Predicated region
    $region38: #{tpu_custom_call.1} parent=1 // pred_check
      _
    $region39: #{tpu_custom_call.1} parent=1 // pred_check_branch
      %175 = sbr.rel (0) target = $region41
    $region40: #{tpu_custom_call.1} parent=1 // pred_region
      %s177 = ssub.s32 128, 128
      %178 = vsyncadd [#allocation5], %s177
      %s180 = sshll.u32 [#allocation11], 4
      %s181 = int_to_ptr.vmem [resolvable:$true] %s180
      %183 = dma.vmem_to_hbm [thread:$0]  %s181, 128, %s5, [#allocation5]
    $region41: #{tpu_custom_call.1} parent=1 // pred_fallthru
      _
    // Predicated region
    $region42: #{tpu_custom_call.1} parent=1 // pred_check
      _
    $region43: #{tpu_custom_call.1} parent=1 // pred_check_branch
      %185 = sbr.rel (0) target = $region45
    $region44: #{tpu_custom_call.1} parent=1 // pred_region
      %186 = dma.done [#allocation5], 128
    $region45: #{tpu_custom_call.1} parent=1 // pred_fallthru
      _
    %187 = vsyncpa [#allocation4], 1
    %188 = vsyncpa [#allocation7], 1
    %189 = vsyncpa [#allocation10], 1
    %190 = vsyncpa [#allocation5], 1

</llo_original>
